<compile_context>
chip_gen: v5e
topology: v5e:2x2
jax: 0.10.0
libtpu: 0.0.40
codegen_flags: <defaults>
</compile_context>

<pallas_src>
import functools

import jax
import jax.numpy as jnp
from jax.experimental import pallas as pl
from jax.experimental.pallas import tpu as pltpu


def _router_kernel(x_ref, w_ref, b_ref, u_ref, router_ref, idx_ref,
                   *, num_experts, top_k):
    x = x_ref[...]                                                   # (TN, D)

    # Fused gating matmul: one MXU pass -> [logits | noise_logits]  (TN, 2E)
    y = jnp.dot(x, w_ref[...], preferred_element_type=jnp.float32) + b_ref[...]
    logits = y[:, :num_experts]
    noise_logits = y[:, num_experts:2 * num_experts]

    # noise = U[0,1) * softplus(noise_logits)   (matches torch.rand_like path)
    noisy = logits + u_ref[...] * jax.nn.softplus(noise_logits)      # (TN, E)

    # --- top-k along experts (iterative argmax; top_k is tiny & static) ---
    col = jax.lax.broadcasted_iota(jnp.int32, noisy.shape, 1)        # (TN, E)
    work = noisy
    sparse = jnp.full_like(noisy, -jnp.inf)
    idx_cols = []
    for _ in range(top_k):
        m = jnp.max(work, axis=-1, keepdims=True)                    # (TN, 1)
        is_max = work == m
        idx = jnp.min(jnp.where(is_max, col, num_experts),
                      axis=-1, keepdims=True)                        # first argmax
        idx_cols.append(idx)
        sel = col == idx
        sparse = jnp.where(sel, noisy, sparse)                       # scatter top-k
        work = jnp.where(sel, -jnp.inf, work)                        # mask it out

    # softmax over the sparse (-inf filled) logits
    mx = jnp.max(sparse, axis=-1, keepdims=True)
    e = jnp.exp(sparse - mx)
    denom = jnp.sum(e, axis=-1, keepdims=True)
    router_ref[...] = (e / denom).astype(router_ref.dtype)
    idx_ref[...] = jnp.concatenate(idx_cols, axis=-1).astype(jnp.int32)


def noisy_topk_router(x, w_router, b_router, w_noise, b_noise, top_k,
                      seed=0, tn=None):
    """x: (B, T, D).  w_*: (E, D), b_*: (E,) — nn.Linear layout.

    Returns (router_probs (B,T,E) f32, topk_indices (B,T,top_k) int32).
    """
    B, T, D = x.shape
    E = w_router.shape[0]
    N = B * T

    # --- token-axis tiling: pad N to a multiple of TN (sublane granularity 8) ---
    # TN sizing note: 2 (double-buffer) * TN * D * itemsize + 2*D*E weights must
    # stay inside scoped VMEM.  TN=512 is a good default for D up to ~4K f32 on
    # all generations (v7x has only 64 MiB total VMEM, so don't go much bigger).
    n8 = ((N + 7) // 8) * 8
    TN = tn if tn is not None else min(512, n8)
    TN = max(8, ((TN + 7) // 8) * 8)
    N_pad = ((n8 + TN - 1) // TN) * TN
    grid = (N_pad // TN,)

    compute_dtype = x.dtype                      # keep bf16 inputs bf16
    xf = x.reshape(N, D).astype(compute_dtype)
    if N_pad != N:
        xf = jnp.pad(xf, ((0, N_pad - N), (0, 0)))

    # Fuse the two gating projections into a single (D, 2E) weight + (1, 2E) bias.
    w_cat = jnp.concatenate([w_router.T, w_noise.T], axis=1).astype(compute_dtype)
    b_cat = jnp.concatenate([b_router, b_noise]).reshape(1, 2 * E).astype(jnp.float32)

    # U[0,1) noise, pre-sampled (torch.rand_like semantics; different RNG bits).
    noise = jax.random.uniform(jax.random.PRNGKey(seed), (N_pad, E),
                               dtype=jnp.float32)

    itemsize = jnp.dtype(compute_dtype).itemsize
    cost = pl.CostEstimate(
        flops=2 * N_pad * D * 2 * E,
        transcendentals=3 * N_pad * E,                     # softplus + softmax exp
        bytes_accessed=(N_pad * D * itemsize               # x in
                        + D * 2 * E * itemsize             # fused weights
                        + N_pad * E * 4                    # noise in
                        + N_pad * E * 4 + N_pad * top_k * 4),  # outputs
    )

    kernel = functools.partial(_router_kernel, num_experts=E, top_k=top_k)
    router, idx = pl.pallas_call(
        kernel,
        out_shape=(jax.ShapeDtypeStruct((N_pad, E), jnp.float32),
                   jax.ShapeDtypeStruct((N_pad, top_k), jnp.int32)),
        grid=grid,
        in_specs=[
            pl.BlockSpec((TN, D), lambda i: (i, 0)),       # x tile (pipelined)
            pl.BlockSpec((D, 2 * E), lambda i: (0, 0)),    # fused W^T (resident)
            pl.BlockSpec((1, 2 * E), lambda i: (0, 0)),    # fused bias (resident)
            pl.BlockSpec((TN, E), lambda i: (i, 0)),       # uniform noise tile
        ],
        out_specs=[
            pl.BlockSpec((TN, E), lambda i: (i, 0)),
            pl.BlockSpec((TN, top_k), lambda i: (i, 0)),
        ],
        compiler_params=pltpu.CompilerParams(
            dimension_semantics=("parallel",)),            # shards across v7x TCs
        cost_estimate=cost,
    )(xf, w_cat, b_cat, noise)

    router = router[:N].reshape(B, T, E)
    idx = idx[:N].reshape(B, T, top_k)                     # int32 (torch: int64)
    return router, idx


if __name__ == "__main__":
    # Small, module-consistent shapes: x is (batch, seq, n_embed).
    B, T, D = 2, 8, 32          # n_embed = 32
    E, K = 8, 2                 # num_experts = 8, top_k = 2

    key = jax.random.PRNGKey(0)
    kx, kw1, kb1, kw2, kb2 = jax.random.split(key, 5)

    x = jax.random.normal(kx, (B, T, D), dtype=jnp.float32)

    # Deterministic parameter init (PyTorch nn.Linear-style uniform bounds).
    bound = 1.0 / (D ** 0.5)
    w_router = jax.random.uniform(kw1, (E, D), minval=-bound, maxval=bound,
                                  dtype=jnp.float32)
    b_router = jax.random.uniform(kb1, (E,), minval=-bound, maxval=bound,
                                  dtype=jnp.float32)
    w_noise = jax.random.uniform(kw2, (E, D), minval=-bound, maxval=bound,
                                 dtype=jnp.float32)
    b_noise = jax.random.uniform(kb2, (E,), minval=-bound, maxval=bound,
                                 dtype=jnp.float32)

    router_out, indices = noisy_topk_router(x, w_router, b_router,
                                            w_noise, b_noise, top_k=K, seed=0)
    jax.block_until_ready((router_out, indices))

    assert router_out.shape == (B, T, E)
    assert indices.shape == (B, T, K)
    # Each token's router output must sum to 1 over experts.
    assert jnp.allclose(jnp.sum(router_out, axis=-1), 1.0, atol=1e-5)
    # Exactly top_k nonzero probabilities per token.
    assert jnp.all(jnp.sum(router_out > 0, axis=-1) == K)
    # Indices are valid experts.
    assert jnp.all((indices >= 0) & (indices < E))

    print("KERNEL_OK")
</pallas_src>

<mosaic_0001>
module attributes {stable_mosaic.version = 11 : i64} {
  func.func @_router_kernel(%arg0: i32, %arg1: memref<16x32xf32, #tpu.memory_space<vmem>>, %arg2: memref<32x16xf32, #tpu.memory_space<vmem>>, %arg3: memref<1x16xf32, #tpu.memory_space<vmem>>, %arg4: memref<16x8xf32, #tpu.memory_space<vmem>>, %arg5: memref<16x8xf32, #tpu.memory_space<vmem>>, %arg6: memref<16x2xi32, #tpu.memory_space<vmem>>) attributes {dimension_semantics = [#tpu.dimension_semantics<parallel>], iteration_bounds = array<i64: 1>, scalar_prefetch = 0 : i64, scratch_operands = 0 : i64, tpu.core_type = #tpu.core_type<tc>, window_params = [{transform_indices = @transform_0, window_bounds = array<i64: 16, 32>}, {pipeline_mode = #tpu.pipeline_mode<synchronous>, transform_indices = @transform_1, window_bounds = array<i64: 32, 16>}, {pipeline_mode = #tpu.pipeline_mode<synchronous>, transform_indices = @transform_2, window_bounds = array<i64: 1, 16>}, {transform_indices = @transform_3, window_bounds = array<i64: 16, 8>}, {transform_indices = @transform_4, window_bounds = array<i64: 16, 8>}, {transform_indices = @transform_5, window_bounds = array<i64: 16, 2>}]} {
    %c0 = arith.constant 0 : index
    %c0_0 = arith.constant 0 : index
    %0 = vector.load %arg1[%c0, %c0_0] : memref<16x32xf32, #tpu.memory_space<vmem>>, vector<16x32xf32>
    %c0_1 = arith.constant 0 : index
    %c0_2 = arith.constant 0 : index
    %1 = vector.load %arg2[%c0_1, %c0_2] : memref<32x16xf32, #tpu.memory_space<vmem>>, vector<32x16xf32>
    %cst = arith.constant dense<0.000000e+00> : vector<16x16xf32>
    %2 = tpu.matmul %0, %1, %cst {dimension_numbers = #tpu.dot_dimension_numbers<[1], [0], [0], [1], [0, 0, 1, 1], [], []>} : vector<16x32xf32>, vector<32x16xf32>, vector<16x16xf32> -> vector<16x16xf32>
    %c0_3 = arith.constant 0 : index
    %c0_4 = arith.constant 0 : index
    %3 = vector.load %arg3[%c0_3, %c0_4] : memref<1x16xf32, #tpu.memory_space<vmem>>, vector<1x16xf32>
    %4 = vector.broadcast %3 : vector<1x16xf32> to vector<16x16xf32>
    %5 = arith.addf %2, %4 : vector<16x16xf32>
    %6 = vector.extract_strided_slice %5 {offsets = [0, 0], sizes = [16, 8], strides = [1, 1]} : vector<16x16xf32> to vector<16x8xf32>
    %7 = vector.extract_strided_slice %5 {offsets = [0, 8], sizes = [16, 8], strides = [1, 1]} : vector<16x16xf32> to vector<16x8xf32>
    %c0_5 = arith.constant 0 : index
    %c0_6 = arith.constant 0 : index
    %8 = vector.load %arg4[%c0_5, %c0_6] : memref<16x8xf32, #tpu.memory_space<vmem>>, vector<16x8xf32>
    %cst_7 = arith.constant 0.000000e+00 : f32
    %9 = vector.broadcast %cst_7 : f32 to vector<16x8xf32>
    %10 = arith.maximumf %7, %9 : vector<16x8xf32>
    %11 = vector.broadcast %cst_7 : f32 to vector<16x8xf32>
    %12 = arith.subf %7, %11 : vector<16x8xf32>
    %13 = arith.cmpf one, %12, %12 : vector<16x8xf32>
    %14 = vector.broadcast %cst_7 : f32 to vector<16x8xf32>
    %15 = arith.addf %7, %14 : vector<16x8xf32>
    %16 = math.absf %12 : vector<16x8xf32>
    %cst_8 = arith.constant 0.000000e+00 : f32
    %17 = vector.broadcast %cst_8 : f32 to vector<16x8xf32>
    %18 = arith.subf %17, %16 : vector<16x8xf32>
    %19 = math.exp %18 : vector<16x8xf32>
    %20 = math.log1p %19 : vector<16x8xf32>
    %21 = arith.addf %10, %20 : vector<16x8xf32>
    %22 = arith.select %13, %15, %21 : vector<16x8xi1>, vector<16x8xf32>
    %23 = arith.mulf %8, %22 : vector<16x8xf32>
    %24 = arith.addf %6, %23 : vector<16x8xf32>
    %25 = tpu.iota {dimensions = array<i32: 1>} : vector<16x8xi32>
    %cst_9 = arith.constant 0xFF800000 : f32
    %26 = vector.broadcast %cst_9 : f32 to vector<16x8xf32>
    %cst_10 = arith.constant dense<0xFF800000> : vector<16xf32>
    %27 = vector.multi_reduction <maximumf>, %24, %cst_10 [1] : vector<16x8xf32> to vector<16xf32>
    %28 = vector.shape_cast %27 : vector<16xf32> to vector<16x1xf32>
    %29 = vector.broadcast %28 : vector<16x1xf32> to vector<16x8xf32>
    %30 = arith.cmpf oeq, %24, %29 : vector<16x8xf32>
    %c8_i32 = arith.constant 8 : i32
    %31 = vector.broadcast %c8_i32 : i32 to vector<16x8xi32>
    %32 = arith.select %30, %25, %31 : vector<16x8xi1>, vector<16x8xi32>
    %cst_11 = arith.constant dense<2147483647> : vector<16xi32>
    %33 = vector.multi_reduction <minsi>, %32, %cst_11 [1] : vector<16x8xi32> to vector<16xi32>
    %34 = vector.shape_cast %33 : vector<16xi32> to vector<16x1xi32>
    %35 = vector.broadcast %34 : vector<16x1xi32> to vector<16x8xi32>
    %36 = arith.cmpi eq, %25, %35 : vector<16x8xi32>
    %37 = arith.select %36, %24, %26 : vector<16x8xi1>, vector<16x8xf32>
    %cst_12 = arith.constant 0xFF800000 : f32
    %38 = vector.broadcast %cst_12 : f32 to vector<16x8xf32>
    %39 = arith.select %36, %38, %24 : vector<16x8xi1>, vector<16x8xf32>
    %cst_13 = arith.constant dense<0xFF800000> : vector<16xf32>
    %40 = vector.multi_reduction <maximumf>, %39, %cst_13 [1] : vector<16x8xf32> to vector<16xf32>
    %41 = vector.shape_cast %40 : vector<16xf32> to vector<16x1xf32>
    %42 = vector.broadcast %41 : vector<16x1xf32> to vector<16x8xf32>
    %43 = arith.cmpf oeq, %39, %42 : vector<16x8xf32>
    %c8_i32_14 = arith.constant 8 : i32
    %44 = vector.broadcast %c8_i32_14 : i32 to vector<16x8xi32>
    %45 = arith.select %43, %25, %44 : vector<16x8xi1>, vector<16x8xi32>
    %cst_15 = arith.constant dense<2147483647> : vector<16xi32>
    %46 = vector.multi_reduction <minsi>, %45, %cst_15 [1] : vector<16x8xi32> to vector<16xi32>
    %47 = vector.shape_cast %46 : vector<16xi32> to vector<16x1xi32>
    %48 = vector.broadcast %47 : vector<16x1xi32> to vector<16x8xi32>
    %49 = arith.cmpi eq, %25, %48 : vector<16x8xi32>
    %50 = arith.select %49, %24, %37 : vector<16x8xi1>, vector<16x8xf32>
    %cst_16 = arith.constant dense<0xFF800000> : vector<16xf32>
    %51 = vector.multi_reduction <maximumf>, %50, %cst_16 [1] : vector<16x8xf32> to vector<16xf32>
    %52 = vector.shape_cast %51 : vector<16xf32> to vector<16x1xf32>
    %53 = vector.broadcast %52 : vector<16x1xf32> to vector<16x8xf32>
    %54 = arith.subf %50, %53 : vector<16x8xf32>
    %55 = math.exp %54 : vector<16x8xf32>
    %cst_17 = arith.constant dense<0.000000e+00> : vector<16xf32>
    %56 = vector.multi_reduction <add>, %55, %cst_17 [1] : vector<16x8xf32> to vector<16xf32>
    %57 = vector.shape_cast %56 : vector<16xf32> to vector<16x1xf32>
    %58 = vector.broadcast %57 : vector<16x1xf32> to vector<16x8xf32>
    %59 = arith.divf %55, %58 : vector<16x8xf32>
    %c0_18 = arith.constant 0 : index
    %c0_19 = arith.constant 0 : index
    %60 = vector.load %arg5[%c0_18, %c0_19] : memref<16x8xf32, #tpu.memory_space<vmem>>, vector<16x8xf32>
    tpu.vector_store %arg5[%c0_18, %c0_19], %59 {strides = array<i32>} : memref<16x8xf32, #tpu.memory_space<vmem>>, vector<16x8xf32>,
    %61 = tpu.concatenate %34, %47 in 1 : vector<16x1xi32>, vector<16x1xi32> -> vector<16x2xi32>
    %c0_20 = arith.constant 0 : index
    %c0_21 = arith.constant 0 : index
    %62 = vector.load %arg6[%c0_20, %c0_21] : memref<16x2xi32, #tpu.memory_space<vmem>>, vector<16x2xi32>
    tpu.vector_store %arg6[%c0_20, %c0_21], %61 {strides = array<i32>} : memref<16x2xi32, #tpu.memory_space<vmem>>, vector<16x2xi32>,
    return
  }
  func.func @transform_0(%arg0: i32) -> (i32, i32) {
    %c0_i32 = arith.constant 0 : i32
    %c0_i32_0 = arith.constant 0 : i32
    return %arg0, %c0_i32 : i32, i32
  }
  func.func @transform_1(%arg0: i32) -> (i32, i32) {
    %c0_i32 = arith.constant 0 : i32
    %c0_i32_0 = arith.constant 0 : i32
    %c0_i32_1 = arith.constant 0 : i32
    return %c0_i32, %c0_i32_0 : i32, i32
  }
  func.func @transform_2(%arg0: i32) -> (i32, i32) {
    %c0_i32 = arith.constant 0 : i32
    %c0_i32_0 = arith.constant 0 : i32
    %c0_i32_1 = arith.constant 0 : i32
    return %c0_i32, %c0_i32_0 : i32, i32
  }
  func.func @transform_3(%arg0: i32) -> (i32, i32) {
    %c0_i32 = arith.constant 0 : i32
    %c0_i32_0 = arith.constant 0 : i32
    return %arg0, %c0_i32 : i32, i32
  }
  func.func @transform_4(%arg0: i32) -> (i32, i32) {
    %c0_i32 = arith.constant 0 : i32
    %c0_i32_0 = arith.constant 0 : i32
    return %arg0, %c0_i32 : i32, i32
  }
  func.func @transform_5(%arg0: i32) -> (i32, i32) {
    %c0_i32 = arith.constant 0 : i32
    %c0_i32_0 = arith.constant 0 : i32
    return %arg0, %c0_i32 : i32, i32
  }
}

</mosaic_0001>

<llo_original>
// kernel: tpu_custom_call.1
$region0: #{tpu_custom_call.1}
  #allocation0 [shape = 'u32[]', space=smem, size = 0x4, offset = 0x4, fixed_abs, tag = 'smem constant byte address 0x4 - core index']
  #allocation1 [shape = 'u32[72,128]{1,0:T(1,128)}', space=vmem, size = 0x9000, scoped, tag = 'internal scratch']
  %s0 = inlined_call_operand.vmem [shape: f32[16,32], index: 0, kind: input, shape index: {}]
  %s1 = inlined_call_operand.vmem [shape: f32[32,16], index: 1, kind: input, shape index: {}]
  %s2 = inlined_call_operand.vmem [shape: f32[1,16], index: 2, kind: input, shape index: {}]
  %s3 = inlined_call_operand.vmem [shape: f32[16,8], index: 3, kind: input, shape index: {}]
  %s4 = inlined_call_operand.vmem [shape: f32[16,8], index: 4, kind: output, shape index: {0}]
  %s5 = inlined_call_operand.vmem [shape: s32[16,2], index: 5, kind: output, shape index: {1}]
  %6 = xla_tuple %s4, %s5
  %s7 = sld [smem:[#allocation0]]
  $region34: #{tpu_custom_call.1} parent=0
    _
  %s9 = ssub.s32 1, %s7
  %s10 = scalar_select 0, %s9, %s7
  // Predicated region
  $region2: #{tpu_custom_call.1} parent=0 // pred_check
    _
  $region3: #{tpu_custom_call.1} parent=0 // pred_check_branch
    %12 = sbr.rel (0) target = $region5
  $region4: #{tpu_custom_call.1} parent=0 // pred_region
    _
  $region5: #{tpu_custom_call.1} parent=0 // pred_fallthru
    _
  // Predicated region
  $region6: #{tpu_custom_call.1} parent=0 // pred_check
    _
  $region7: #{tpu_custom_call.1} parent=0 // pred_check_branch
    %14 = sbr.rel (0) target = $region9
  $region8: #{tpu_custom_call.1} parent=0 // pred_region
    _
  $region9: #{tpu_custom_call.1} parent=0 // pred_fallthru
    _
  // Predicated region
  $region10: #{tpu_custom_call.1} parent=0 // pred_check
    _
  $region11: #{tpu_custom_call.1} parent=0 // pred_check_branch
    %16 = sbr.rel (0) target = $region13
  $region12: #{tpu_custom_call.1} parent=0 // pred_region
    _
  $region13: #{tpu_custom_call.1} parent=0 // pred_fallthru
    _
  // Predicated region
  $region14: #{tpu_custom_call.1} parent=0 // pred_check
    _
  $region15: #{tpu_custom_call.1} parent=0 // pred_check_branch
    %18 = sbr.rel (0) target = $region17
  $region16: #{tpu_custom_call.1} parent=0 // pred_region
    _
  $region17: #{tpu_custom_call.1} parent=0 // pred_fallthru
    _
  %v19 = vld [vmem:[%s0] sm:$0xff]
  %v20 = vld [vmem:[%s0 + $0x8] sm:$0xff]
  %v21 = vld [vmem:[%s1] sm:$0xff]
  %v22 = vld [vmem:[%s1 + $0x8] sm:$0xff]
  %v23 = vld [vmem:[%s1 + $0x10] sm:$0xff]
  %v24 = vld [vmem:[%s1 + $0x18] sm:$0xff]
  %v25 = vld [vmem:[%s2] sm:$0x1]
  %v27 = vperm.slane %v25, 0
  %vm29 = vcmask 261120
  %v31 = vsel %vm29, %v19, 0
  %v34 = vsel %vm29, %v20, 0
  %36 = vmatpush.msra.mxu0 0.0
  %37 = vmatpush.msra.mxu0 0.0
  %38 = vmatpush.msra.mxu0 0.0
  %39 = vmatpush.msra.mxu0 0.0
  %40 = vmatpush.msra.mxu0 0.0
  %41 = vmatpush.msra.mxu0 0.0
  %42 = vmatpush.msra.mxu0 0.0
  %43 = vmatpush.msra.mxu0 0.0
  %44 = vmatpush.msra.mxu0 0.0
  %45 = vmatpush.msra.mxu0 0.0
  %46 = vmatpush.msra.mxu0 0.0
  %47 = vmatpush.msra.mxu0 0.0
  %48 = vmatpush.msra.mxu0 %v24
  %49 = vmatpush.msra.mxu0 %v23
  %50 = vmatpush.msra.mxu0 %v22
  %51 = vmatpush.msra.mxu0 %v21
  %52 = vmatmul.f32.gmra.mxu0 %v31
  %v53 = vpop.f32.mrf.mxu0
  %v54 = vadd.f32 %v27, %v53
  %55 = vmatmul.f32.gmra.mxu0 %v34
  %v56 = vpop.f32.mrf.mxu0
  %v57 = vadd.f32 %v27, %v56
  %58 = vdwg.mxu0
  %v59 = vld [vmem:[%s3] sm:$0xff]
  %v60 = vld [vmem:[%s3 + $0x8] sm:$0xff]
  %v61 = vmax.f32 %v54, 0.0
  %v62 = vmax.f32 %v57, 0.0
  %vm63 = vcmp.ne.f32.partialorder %v54, %v54
  %vm64 = vcmp.ne.f32.partialorder %v57, %v57
  %v65 = vadd.f32 %v54, 0.0
  %v66 = vadd.f32 %v57, 0.0
  %v67 = vand.u32 2147483647, %v54
  %v68 = vand.u32 2147483647, %v57
  %v69 = vsub.f32 0.0, %v67
  %v70 = vsub.f32 0.0, %v68
  %v71 = vmul.f32 %v69, 1.442695
  %v72 = vpow.pop %v71
  %v73 = vmul.f32 %v70, 1.442695
  %v74 = vpow.pop %v73
  %v75 = vadd.f32 %v72, 1.0
  %v76 = vlog2.pop %v75
  %v77 = vmul.f32 %v76, 0.6931472
  %v78 = vmul.f32 -0.5, %v72
  %v79 = vadd.f32 %v78, 1.0
  %v80 = vmul.f32 %v79, %v72
  %v81 = vand.u32 2147483647, %v72
  %vm82 = vcmp.lt.f32.partialorder %v81, 0.0004427343
  %v83 = vsel %vm82, %v80, %v77
  %v84 = vadd.f32 %v74, 1.0
  %v85 = vlog2.pop %v84
  %v86 = vmul.f32 %v85, 0.6931472
  %v87 = vmul.f32 -0.5, %v74
  %v88 = vadd.f32 %v87, 1.0
  %v89 = vmul.f32 %v88, %v74
  %v90 = vand.u32 2147483647, %v74
  %vm91 = vcmp.lt.f32.partialorder %v90, 0.0004427343
  %v92 = vsel %vm91, %v89, %v86
  %v93 = vadd.f32 %v61, %v83
  %v94 = vadd.f32 %v62, %v92
  %v95 = vsel %vm63, %v65, %v93
  %v96 = vsel %vm64, %v66, %v94
  %99 = vrot.lane.b32.xlu0 %v95, 120
  %v100 = vpop.permute.xlu0 %99
  %101 = vrot.lane.b32.xlu0 %v96, 120
  %v102 = vpop.permute.xlu0 %101
  %v105 = vmul.f32 %v59, %v100
  %v106 = vmul.f32 %v60, %v102
  %v107 = vadd.f32 %v54, %v105
  %v108 = vadd.f32 %v57, %v106
  %v109 = vlaneseq
  %v110 = vand.u32 %v109, 127
  %vm111 = vcmask 64512
  %v112 = vsel %vm111, %v107, -inf
  %113 = vmax.xlane.f32.xlu0 %v112
  %v114 = vpop.xlane.xlu0 %113
  %v115 = vsel %vm111, %v108, -inf
  %116 = vmax.xlane.f32.xlu0 %v115
  %v117 = vpop.xlane.xlu0 %116
  %vm118 = vcmp.eq.f32.partialorder %v107, %v114
  %vm119 = vcmp.eq.f32.partialorder %v108, %v117
  %v120 = vsel %vm118, %v110, 8
  %v121 = vsel %vm119, %v110, 8
  %v122 = vsel %vm111, %v120, 2147483647
  %v123 = vand.u32 %v122, 65535
  %v124 = vshra.s32 %v122, 16
  %v125 = vcvt.s32.f32 %v123
  %v126 = vcvt.s32.f32 %v124
  %127 = vmin.xlane.f32.xlu0 %v126
  %v128 = vpop.xlane.xlu0 %127
  %vm129 = vcmp.eq.f32.partialorder %v126, %v128
  %v130 = vsel %vm129, %v125, inf
  %131 = vmin.xlane.f32.xlu0 %v130
  %v132 = vpop.xlane.xlu0 %131
  %v133 = vcvt.f32.s32 %v132
  %v134 = vcvt.f32.s32 %v128
  %v135 = vshll.u32 %v134, 16
  %v136 = vadd.s32 %v135, %v133
  %v137 = vsel %vm111, %v121, 2147483647
  %v138 = vand.u32 %v137, 65535
  %v139 = vshra.s32 %v137, 16
  %v140 = vcvt.s32.f32 %v138
  %v141 = vcvt.s32.f32 %v139
  %142 = vmin.xlane.f32.xlu0 %v141
  %v143 = vpop.xlane.xlu0 %142
  %vm144 = vcmp.eq.f32.partialorder %v141, %v143
  %v145 = vsel %vm144, %v140, inf
  %146 = vmin.xlane.f32.xlu0 %v145
  %v147 = vpop.xlane.xlu0 %146
  %v148 = vcvt.f32.s32 %v147
  %v149 = vcvt.f32.s32 %v143
  %v150 = vshll.u32 %v149, 16
  %v151 = vadd.s32 %v150, %v148
  %vm152 = vcmp.eq.s32.totalorder %v110, %v136
  %vm153 = vcmp.eq.s32.totalorder %v110, %v151
  %v154 = vsel %vm152, %v107, -inf
  %v155 = vsel %vm153, %v108, -inf
  %v156 = vsel %vm152, -inf, %v107
  %v157 = vsel %vm153, -inf, %v108
  %v158 = vsel %vm111, %v156, -inf
  %159 = vmax.xlane.f32.xlu0 %v158
  %v160 = vpop.xlane.xlu0 %159
  %v161 = vsel %vm111, %v157, -inf
  %162 = vmax.xlane.f32.xlu0 %v161
  %v163 = vpop.xlane.xlu0 %162
  %vm164 = vcmp.eq.f32.partialorder %v156, %v160
  %vm165 = vcmp.eq.f32.partialorder %v157, %v163
  %v166 = vsel %vm164, %v110, 8
  %v167 = vsel %vm165, %v110, 8
  %v168 = vsel %vm111, %v166, 2147483647
  %v169 = vand.u32 %v168, 65535
  %v170 = vshra.s32 %v168, 16
  %v171 = vcvt.s32.f32 %v169
  %v172 = vcvt.s32.f32 %v170
  %173 = vmin.xlane.f32.xlu0 %v172
  %v174 = vpop.xlane.xlu0 %173
  %vm175 = vcmp.eq.f32.partialorder %v172, %v174
  %v176 = vsel %vm175, %v171, inf
  %177 = vmin.xlane.f32.xlu0 %v176
  %v178 = vpop.xlane.xlu0 %177
  %v179 = vcvt.f32.s32 %v178
  %v180 = vcvt.f32.s32 %v174
  %v181 = vshll.u32 %v180, 16
  %v182 = vadd.s32 %v181, %v179
  %v183 = vsel %vm111, %v167, 2147483647
  %v184 = vand.u32 %v183, 65535
  %v185 = vshra.s32 %v183, 16
  %v186 = vcvt.s32.f32 %v184
  %v187 = vcvt.s32.f32 %v185
  %188 = vmin.xlane.f32.xlu0 %v187
  %v189 = vpop.xlane.xlu0 %188
  %vm190 = vcmp.eq.f32.partialorder %v187, %v189
  %v191 = vsel %vm190, %v186, inf
  %192 = vmin.xlane.f32.xlu0 %v191
  %v193 = vpop.xlane.xlu0 %192
  %v194 = vcvt.f32.s32 %v193
  %v195 = vcvt.f32.s32 %v189
  %v196 = vshll.u32 %v195, 16
  %v197 = vadd.s32 %v196, %v194
  %vm198 = vcmp.eq.s32.totalorder %v110, %v182
  %vm199 = vcmp.eq.s32.totalorder %v110, %v197
  %v200 = vsel %vm198, %v107, %v154
  %v201 = vsel %vm199, %v108, %v155
  %v202 = vsel %vm111, %v200, -inf
  %203 = vmax.xlane.f32.xlu0 %v202
  %v204 = vpop.xlane.xlu0 %203
  %v205 = vsel %vm111, %v201, -inf
  %206 = vmax.xlane.f32.xlu0 %v205
  %v207 = vpop.xlane.xlu0 %206
  %v208 = vsub.f32 %v200, %v204
  %v209 = vsub.f32 %v201, %v207
  %v210 = vmul.f32 %v208, 1.442695
  %v211 = vpow.pop %v210
  %v212 = vmul.f32 %v209, 1.442695
  %v213 = vpow.pop %v212
  %v214 = vsel %vm111, %v211, 0.0
  %215 = vadd.xlane.f32.xlu0 %v214
  %v216 = vpop.xlane.xlu0 %215
  %v217 = vsel %vm111, %v213, 0.0
  %218 = vadd.xlane.f32.xlu0 %v217
  %v219 = vpop.xlane.xlu0 %218
  %v220 = vrcp.pop %v216
  %v221 = vmul.f32 %v216, %v220
  %v222 = vsub.f32 1.0, %v221
  %v223 = vmul.f32 %v220, %v222
  %v224 = vadd.f32 %v220, %v223
  %vm225 = vweird.f32 %v216
  %vm226 = vweird.f32 %v220
  %vm227 = vmor %vm225, %vm226
  %v228 = vsel %vm227, %v220, %v224
  %v229 = vand.u32 2147483647, %v216
  %vm230 = vcmp.eq.f32.partialorder %v229, 8.507059e+37
  %v231 = vand.u32 %v216, 2147483648
  %v232 = vor.u32 1.1754944e-38, %v231
  %v233 = vsel %vm230, %v232, %v228
  %v234 = vmul.f32 %v211, %v233
  %v235 = vrcp.pop %v219
  %v236 = vmul.f32 %v219, %v235
  %v237 = vsub.f32 1.0, %v236
  %v238 = vmul.f32 %v235, %v237
  %v239 = vadd.f32 %v235, %v238
  %vm240 = vweird.f32 %v219
  %vm241 = vweird.f32 %v235
  %vm242 = vmor %vm240, %vm241
  %v243 = vsel %vm242, %v235, %v239
  %v244 = vand.u32 2147483647, %v219
  %vm245 = vcmp.eq.f32.partialorder %v244, 8.507059e+37
  %v246 = vand.u32 %v219, 2147483648
  %v247 = vor.u32 1.1754944e-38, %v246
  %v248 = vsel %vm245, %v247, %v243
  %v249 = vmul.f32 %v213, %v248
  %250 = vst.msk [vmem:[%s4] sm:$0xff] %vm111, %v234
  %251 = vst.msk [vmem:[%s4 + $0x8] sm:$0xff] %vm111, %v249
  %vm252 = vcmask 7168
  %v253 = vsel %vm252, %v136, %v182
  %v254 = vsel %vm252, %v151, %v197
  %vm255 = vcmask 15360
  %256 = vst.msk [vmem:[%s5] sm:$0xff] %vm255, %v253
  %257 = vst.msk [vmem:[%s5 + $0x8] sm:$0xff] %vm255, %v254
  // Predicated region
  $region18: #{tpu_custom_call.1} parent=0 // pred_check
    _
  $region19: #{tpu_custom_call.1} parent=0 // pred_check_branch
    %259 = sbr.rel (0) target = $region21
  $region20: #{tpu_custom_call.1} parent=0 // pred_region
    _
  $region21: #{tpu_custom_call.1} parent=0 // pred_fallthru
    _
  // Predicated region
  $region22: #{tpu_custom_call.1} parent=0 // pred_check
    _
  $region23: #{tpu_custom_call.1} parent=0 // pred_check_branch
    %261 = sbr.rel (0) target = $region25
  $region24: #{tpu_custom_call.1} parent=0 // pred_region
    _
  $region25: #{tpu_custom_call.1} parent=0 // pred_fallthru
    _
  // Predicated region
  $region26: #{tpu_custom_call.1} parent=0 // pred_check
    _
  $region27: #{tpu_custom_call.1} parent=0 // pred_check_branch
    %263 = sbr.rel (0) target = $region29
  $region28: #{tpu_custom_call.1} parent=0 // pred_region
    _
  $region29: #{tpu_custom_call.1} parent=0 // pred_fallthru
    _
  // Predicated region
  $region30: #{tpu_custom_call.1} parent=0 // pred_check
    _
  $region31: #{tpu_custom_call.1} parent=0 // pred_check_branch
    %265 = sbr.rel (0) target = $region33
  $region32: #{tpu_custom_call.1} parent=0 // pred_region
    _
  $region33: #{tpu_custom_call.1} parent=0 // pred_fallthru
    _

</llo_original>
